<compile_context>
chip_gen: v6e
topology: v6e:2x2x1
jax: 0.10.0
libtpu: 0.0.40
codegen_flags: <defaults>
</compile_context>

<pallas_src>
import functools

import jax
import jax.numpy as jnp
from jax import lax
from jax.experimental import pallas as pl
from jax.experimental.pallas import tpu as pltpu


def _lstm_fc_kernel(tok_ref, emb_ref, wih_ref, whh_ref, b_ref, wfc_ref, bfc_ref,
                    out_ref, xbuf_ref, *, T, B, Bp, H):
    """Embedding gather + LSTM recurrence + final Linear, all resident in VMEM.

    tok_ref  : (B*T,)    int32  SMEM   token ids, row-major (b, t)
    emb_ref  : (V, E)    f32    VMEM   embedding table
    wih_ref  : (E, 4H)   bf16   VMEM   input->gates weights (gate order i,f,g,o)
    whh_ref  : (H, 4H)   bf16   VMEM   hidden->gates weights (lane-dense)
    b_ref    : (1, 4H)   f32    VMEM   combined bias (b_ih + b_hh)
    wfc_ref  : (H, O)    bf16   VMEM   final Linear weight (pre-transposed)
    bfc_ref  : (1, O)    f32    VMEM   final Linear bias
    out_ref  : (Bp, O)   f32    VMEM
    xbuf_ref : (T*Bp, E) f32    VMEM   scratch: time-major embedded sequence
    """
    # ---- in-kernel embedding gather (B*T tiny dynamic row copies) ----------
    xbuf_ref[...] = jnp.zeros_like(xbuf_ref)          # keep padded rows finite
    for t in range(T):
        for b in range(B):
            tok = tok_ref[b * T + t]                   # scalar from SMEM
            xbuf_ref[pl.ds(t * Bp + b, 1), :] = emb_ref[pl.ds(tok, 1), :]

    # ---- hoisted input projection: ONE big MXU matmul, bias folded in ------
    zx_full = (jnp.dot(xbuf_ref[...].astype(jnp.bfloat16), wih_ref[...],
                       preferred_element_type=jnp.float32)
               + b_ref[...])                           # (T*Bp, 4H) f32

    whh = whh_ref[...]                                 # (H, 4H) bf16
    wfc = wfc_ref[...]                                 # (H, O)  bf16

    h = jnp.zeros((Bp, H), jnp.float32)
    c = jnp.zeros((Bp, H), jnp.float32)

    # Fully (statically) unrolled recurrence: T is small and static.
    for t in range(T):
        # One lane-dense (Bp,H)@(H,4H) MXU push per step on the serial chain.
        pre = (zx_full[t * Bp:(t + 1) * Bp, :]
               + jnp.dot(h.astype(jnp.bfloat16), whh,
                         preferred_element_type=jnp.float32))   # (Bp, 4H) f32
        sg = jax.nn.sigmoid(pre)                       # 1 EUP pass, full vreg
        i_g = sg[:, 0 * H:1 * H]
        f_g = sg[:, 1 * H:2 * H]
        o_g = sg[:, 3 * H:4 * H]
        g_g = jnp.tanh(pre[:, 2 * H:3 * H])            # 1 EUP pass (g lanes)
        c = f_g * c + i_g * g_g
        h = o_g * jnp.tanh(c)                          # 1 EUP pass

    out_ref[...] = (jnp.dot(h.astype(jnp.bfloat16), wfc,
                            preferred_element_type=jnp.float32)
                    + bfc_ref[...])


def prepare_params(params):
    """One-time weight layout prep (hoisted off the per-call serving path)."""
    H = params["w_hh"].shape[1]
    O = params["w_fc"].shape[0]
    return {
        "emb": params["embedding"].astype(jnp.float32),                 # (V, E)
        "wih_t": jnp.transpose(params["w_ih"]).astype(jnp.bfloat16),    # (E, 4H)
        "whh_t": jnp.transpose(params["w_hh"]).astype(jnp.bfloat16),    # (H, 4H)
        "b": (params["b_ih"] + params["b_hh"]).reshape(1, 4 * H)
             .astype(jnp.float32),                                      # (1, 4H)
        "wfc_t": jnp.transpose(params["w_fc"]).astype(jnp.bfloat16),    # (H, O)
        "bfc": params["b_fc"].reshape(1, O).astype(jnp.float32),        # (1, O)
    }


def french_sentiment_forward(x_tokens, prepped):
    """x_tokens: (B, T) int32 token ids.  Returns (B, output_dim) f32."""
    B, T = x_tokens.shape
    V, E = prepped["emb"].shape
    H = prepped["whh_t"].shape[0]
    O = prepped["wfc_t"].shape[1]
    Bp = max(8, ((B + 7) // 8) * 8)          # pad batch to a sublane multiple

    tok_flat = x_tokens.reshape(B * T).astype(jnp.int32)

    kernel = functools.partial(_lstm_fc_kernel, T=T, B=B, Bp=Bp, H=H)
    vmem = pltpu.MemorySpace.VMEM
    smem = pltpu.MemorySpace.SMEM
    out = pl.pallas_call(
        kernel,
        out_shape=jax.ShapeDtypeStruct((Bp, O), jnp.float32),
        in_specs=[pl.BlockSpec(memory_space=smem)]          # token ids
                 + [pl.BlockSpec(memory_space=vmem)] * 6,   # table + weights
        out_specs=pl.BlockSpec(memory_space=vmem),
        scratch_shapes=[pltpu.VMEM((T * Bp, E), jnp.float32)],
    )(tok_flat, prepped["emb"], prepped["wih_t"], prepped["whh_t"],
      prepped["b"], prepped["wfc_t"], prepped["bfc"])
    return out[:B]


def reference_forward(x_tokens, params):
    """Pure-JAX f32 reference replicating torch semantics (for validation)."""
    emb = jnp.take(params["embedding"], x_tokens, axis=0)         # (B, T, E)
    H = params["w_hh"].shape[1]
    wih_t = params["w_ih"].T
    whh_t = params["w_hh"].T
    b = params["b_ih"] + params["b_hh"]

    def step(carry, x_t):
        h, c = carry
        z = x_t @ wih_t + h @ whh_t + b
        i = jax.nn.sigmoid(z[:, 0 * H:1 * H])
        f = jax.nn.sigmoid(z[:, 1 * H:2 * H])
        g = jnp.tanh(z[:, 2 * H:3 * H])
        o = jax.nn.sigmoid(z[:, 3 * H:4 * H])
        c = f * c + i * g
        h = o * jnp.tanh(c)
        return (h, c), None

    B = x_tokens.shape[0]
    h0 = jnp.zeros((B, H), jnp.float32)
    c0 = jnp.zeros((B, H), jnp.float32)
    (h_final, _), _ = lax.scan(step, (h0, c0), jnp.transpose(emb, (1, 0, 2)))
    return h_final @ params["w_fc"].T + params["b_fc"]


def init_params(key, input_dim, embedding_dim, hidden_dim, output_dim):
    ks = jax.random.split(key, 7)
    s = 0.1
    return {
        "embedding": s * jax.random.normal(ks[0], (input_dim, embedding_dim), jnp.float32),
        "w_ih": s * jax.random.normal(ks[1], (4 * hidden_dim, embedding_dim), jnp.float32),
        "w_hh": s * jax.random.normal(ks[2], (4 * hidden_dim, hidden_dim), jnp.float32),
        "b_ih": s * jax.random.normal(ks[3], (4 * hidden_dim,), jnp.float32),
        "b_hh": s * jax.random.normal(ks[4], (4 * hidden_dim,), jnp.float32),
        "w_fc": s * jax.random.normal(ks[5], (output_dim, hidden_dim), jnp.float32),
        "b_fc": s * jax.random.normal(ks[6], (output_dim,), jnp.float32),
    }


if __name__ == "__main__":
    input_dim = 64      # vocab size
    embedding_dim = 32
    hidden_dim = 32
    output_dim = 4
    batch = 2
    seq = 8

    key = jax.random.PRNGKey(0)
    k_par, k_tok = jax.random.split(key)
    params = init_params(k_par, input_dim, embedding_dim, hidden_dim, output_dim)
    x = jax.random.randint(k_tok, (batch, seq), 0, input_dim, dtype=jnp.int32)

    # One-time weight layout prep (off the serving path), then jit the forward
    # so the token reshape + pallas_call + output slice are a single XLA launch.
    prepped = jax.tree.map(jax.block_until_ready, prepare_params(params))
    fwd = jax.jit(french_sentiment_forward)

    out = jax.block_until_ready(fwd(x, prepped))
    ref = jax.block_until_ready(reference_forward(x, params))

    assert out.shape == (batch, output_dim)
    # Tolerance accounts for intentional bf16 MXU inputs (f32 accumulation).
    assert jnp.allclose(out, ref, atol=1e-2, rtol=1e-2), "mismatch vs reference"

    print("KERNEL_OK")
</pallas_src>

<mosaic_0001>
module attributes {stable_mosaic.version = 11 : i64} {
  func.func @_lstm_fc_kernel(%arg0: memref<16xi32, #tpu.memory_space<smem>>, %arg1: memref<64x32xf32, #tpu.memory_space<vmem>>, %arg2: memref<32x128xbf16, #tpu.memory_space<vmem>>, %arg3: memref<32x128xbf16, #tpu.memory_space<vmem>>, %arg4: memref<1x128xf32, #tpu.memory_space<vmem>>, %arg5: memref<32x4xbf16, #tpu.memory_space<vmem>>, %arg6: memref<1x4xf32, #tpu.memory_space<vmem>>, %arg7: memref<8x4xf32, #tpu.memory_space<vmem>>, %arg8: memref<64x32xf32, #tpu.memory_space<vmem>>) attributes {dimension_semantics = [], scalar_prefetch = 0 : i64, scratch_operands = 1 : i64, tpu.core_type = #tpu.core_type<tc>} {
    %cst = arith.constant 0.000000e+00 : f32
    %0 = vector.broadcast %cst : f32 to vector<64x32xf32>
    %c0 = arith.constant 0 : index
    %c0_0 = arith.constant 0 : index
    %1 = vector.load %arg8[%c0, %c0_0] : memref<64x32xf32, #tpu.memory_space<vmem>>, vector<64x32xf32>
    tpu.vector_store %arg8[%c0, %c0_0], %0 {strides = array<i32>} : memref<64x32xf32, #tpu.memory_space<vmem>>, vector<64x32xf32>,
    %c0_1 = arith.constant 0 : index
    %2 = memref.load %arg0[%c0_1] : memref<16xi32, #tpu.memory_space<smem>>
    %3 = arith.index_cast %2 : i32 to index
    %c0_2 = arith.constant 0 : index
    %4 = vector.load %arg1[%3, %c0_2] : memref<64x32xf32, #tpu.memory_space<vmem>>, vector<1x32xf32>
    %c0_3 = arith.constant 0 : index
    %c0_4 = arith.constant 0 : index
    %5 = vector.load %arg8[%c0_3, %c0_4] : memref<64x32xf32, #tpu.memory_space<vmem>>, vector<1x32xf32>
    tpu.vector_store %arg8[%c0_3, %c0_4], %4 {strides = array<i32>} : memref<64x32xf32, #tpu.memory_space<vmem>>, vector<1x32xf32>,
    %c8 = arith.constant 8 : index
    %6 = memref.load %arg0[%c8] : memref<16xi32, #tpu.memory_space<smem>>
    %7 = arith.index_cast %6 : i32 to index
    %c0_5 = arith.constant 0 : index
    %8 = vector.load %arg1[%7, %c0_5] : memref<64x32xf32, #tpu.memory_space<vmem>>, vector<1x32xf32>
    %c1 = arith.constant 1 : index
    %c0_6 = arith.constant 0 : index
    %9 = vector.load %arg8[%c1, %c0_6] : memref<64x32xf32, #tpu.memory_space<vmem>>, vector<1x32xf32>
    tpu.vector_store %arg8[%c1, %c0_6], %8 {strides = array<i32>} : memref<64x32xf32, #tpu.memory_space<vmem>>, vector<1x32xf32>,
    %c1_7 = arith.constant 1 : index
    %10 = memref.load %arg0[%c1_7] : memref<16xi32, #tpu.memory_space<smem>>
    %11 = arith.index_cast %10 : i32 to index
    %c0_8 = arith.constant 0 : index
    %12 = vector.load %arg1[%11, %c0_8] : memref<64x32xf32, #tpu.memory_space<vmem>>, vector<1x32xf32>
    %c8_9 = arith.constant 8 : index
    %c0_10 = arith.constant 0 : index
    %13 = vector.load %arg8[%c8_9, %c0_10] : memref<64x32xf32, #tpu.memory_space<vmem>>, vector<1x32xf32>
    tpu.vector_store %arg8[%c8_9, %c0_10], %12 {strides = array<i32>} : memref<64x32xf32, #tpu.memory_space<vmem>>, vector<1x32xf32>,
    %c9 = arith.constant 9 : index
    %14 = memref.load %arg0[%c9] : memref<16xi32, #tpu.memory_space<smem>>
    %15 = arith.index_cast %14 : i32 to index
    %c0_11 = arith.constant 0 : index
    %16 = vector.load %arg1[%15, %c0_11] : memref<64x32xf32, #tpu.memory_space<vmem>>, vector<1x32xf32>
    %c9_12 = arith.constant 9 : index
    %c0_13 = arith.constant 0 : index
    %17 = vector.load %arg8[%c9_12, %c0_13] : memref<64x32xf32, #tpu.memory_space<vmem>>, vector<1x32xf32>
    tpu.vector_store %arg8[%c9_12, %c0_13], %16 {strides = array<i32>} : memref<64x32xf32, #tpu.memory_space<vmem>>, vector<1x32xf32>,
    %c2 = arith.constant 2 : index
    %18 = memref.load %arg0[%c2] : memref<16xi32, #tpu.memory_space<smem>>
    %19 = arith.index_cast %18 : i32 to index
    %c0_14 = arith.constant 0 : index
    %20 = vector.load %arg1[%19, %c0_14] : memref<64x32xf32, #tpu.memory_space<vmem>>, vector<1x32xf32>
    %c16 = arith.constant 16 : index
    %c0_15 = arith.constant 0 : index
    %21 = vector.load %arg8[%c16, %c0_15] : memref<64x32xf32, #tpu.memory_space<vmem>>, vector<1x32xf32>
    tpu.vector_store %arg8[%c16, %c0_15], %20 {strides = array<i32>} : memref<64x32xf32, #tpu.memory_space<vmem>>, vector<1x32xf32>,
    %c10 = arith.constant 10 : index
    %22 = memref.load %arg0[%c10] : memref<16xi32, #tpu.memory_space<smem>>
    %23 = arith.index_cast %22 : i32 to index
    %c0_16 = arith.constant 0 : index
    %24 = vector.load %arg1[%23, %c0_16] : memref<64x32xf32, #tpu.memory_space<vmem>>, vector<1x32xf32>
    %c17 = arith.constant 17 : index
    %c0_17 = arith.constant 0 : index
    %25 = vector.load %arg8[%c17, %c0_17] : memref<64x32xf32, #tpu.memory_space<vmem>>, vector<1x32xf32>
    tpu.vector_store %arg8[%c17, %c0_17], %24 {strides = array<i32>} : memref<64x32xf32, #tpu.memory_space<vmem>>, vector<1x32xf32>,
    %c3 = arith.constant 3 : index
    %26 = memref.load %arg0[%c3] : memref<16xi32, #tpu.memory_space<smem>>
    %27 = arith.index_cast %26 : i32 to index
    %c0_18 = arith.constant 0 : index
    %28 = vector.load %arg1[%27, %c0_18] : memref<64x32xf32, #tpu.memory_space<vmem>>, vector<1x32xf32>
    %c24 = arith.constant 24 : index
    %c0_19 = arith.constant 0 : index
    %29 = vector.load %arg8[%c24, %c0_19] : memref<64x32xf32, #tpu.memory_space<vmem>>, vector<1x32xf32>
    tpu.vector_store %arg8[%c24, %c0_19], %28 {strides = array<i32>} : memref<64x32xf32, #tpu.memory_space<vmem>>, vector<1x32xf32>,
    %c11 = arith.constant 11 : index
    %30 = memref.load %arg0[%c11] : memref<16xi32, #tpu.memory_space<smem>>
    %31 = arith.index_cast %30 : i32 to index
    %c0_20 = arith.constant 0 : index
    %32 = vector.load %arg1[%31, %c0_20] : memref<64x32xf32, #tpu.memory_space<vmem>>, vector<1x32xf32>
    %c25 = arith.constant 25 : index
    %c0_21 = arith.constant 0 : index
    %33 = vector.load %arg8[%c25, %c0_21] : memref<64x32xf32, #tpu.memory_space<vmem>>, vector<1x32xf32>
    tpu.vector_store %arg8[%c25, %c0_21], %32 {strides = array<i32>} : memref<64x32xf32, #tpu.memory_space<vmem>>, vector<1x32xf32>,
    %c4 = arith.constant 4 : index
    %34 = memref.load %arg0[%c4] : memref<16xi32, #tpu.memory_space<smem>>
    %35 = arith.index_cast %34 : i32 to index
    %c0_22 = arith.constant 0 : index
    %36 = vector.load %arg1[%35, %c0_22] : memref<64x32xf32, #tpu.memory_space<vmem>>, vector<1x32xf32>
    %c32 = arith.constant 32 : index
    %c0_23 = arith.constant 0 : index
    %37 = vector.load %arg8[%c32, %c0_23] : memref<64x32xf32, #tpu.memory_space<vmem>>, vector<1x32xf32>
    tpu.vector_store %arg8[%c32, %c0_23], %36 {strides = array<i32>} : memref<64x32xf32, #tpu.memory_space<vmem>>, vector<1x32xf32>,
    %c12 = arith.constant 12 : index
    %38 = memref.load %arg0[%c12] : memref<16xi32, #tpu.memory_space<smem>>
    %39 = arith.index_cast %38 : i32 to index
    %c0_24 = arith.constant 0 : index
    %40 = vector.load %arg1[%39, %c0_24] : memref<64x32xf32, #tpu.memory_space<vmem>>, vector<1x32xf32>
    %c33 = arith.constant 33 : index
    %c0_25 = arith.constant 0 : index
    %41 = vector.load %arg8[%c33, %c0_25] : memref<64x32xf32, #tpu.memory_space<vmem>>, vector<1x32xf32>
    tpu.vector_store %arg8[%c33, %c0_25], %40 {strides = array<i32>} : memref<64x32xf32, #tpu.memory_space<vmem>>, vector<1x32xf32>,
    %c5 = arith.constant 5 : index
    %42 = memref.load %arg0[%c5] : memref<16xi32, #tpu.memory_space<smem>>
    %43 = arith.index_cast %42 : i32 to index
    %c0_26 = arith.constant 0 : index
    %44 = vector.load %arg1[%43, %c0_26] : memref<64x32xf32, #tpu.memory_space<vmem>>, vector<1x32xf32>
    %c40 = arith.constant 40 : index
    %c0_27 = arith.constant 0 : index
    %45 = vector.load %arg8[%c40, %c0_27] : memref<64x32xf32, #tpu.memory_space<vmem>>, vector<1x32xf32>
    tpu.vector_store %arg8[%c40, %c0_27], %44 {strides = array<i32>} : memref<64x32xf32, #tpu.memory_space<vmem>>, vector<1x32xf32>,
    %c13 = arith.constant 13 : index
    %46 = memref.load %arg0[%c13] : memref<16xi32, #tpu.memory_space<smem>>
    %47 = arith.index_cast %46 : i32 to index
    %c0_28 = arith.constant 0 : index
    %48 = vector.load %arg1[%47, %c0_28] : memref<64x32xf32, #tpu.memory_space<vmem>>, vector<1x32xf32>
    %c41 = arith.constant 41 : index
    %c0_29 = arith.constant 0 : index
    %49 = vector.load %arg8[%c41, %c0_29] : memref<64x32xf32, #tpu.memory_space<vmem>>, vector<1x32xf32>
    tpu.vector_store %arg8[%c41, %c0_29], %48 {strides = array<i32>} : memref<64x32xf32, #tpu.memory_space<vmem>>, vector<1x32xf32>,
    %c6 = arith.constant 6 : index
    %50 = memref.load %arg0[%c6] : memref<16xi32, #tpu.memory_space<smem>>
    %51 = arith.index_cast %50 : i32 to index
    %c0_30 = arith.constant 0 : index
    %52 = vector.load %arg1[%51, %c0_30] : memref<64x32xf32, #tpu.memory_space<vmem>>, vector<1x32xf32>
    %c48 = arith.constant 48 : index
    %c0_31 = arith.constant 0 : index
    %53 = vector.load %arg8[%c48, %c0_31] : memref<64x32xf32, #tpu.memory_space<vmem>>, vector<1x32xf32>
    tpu.vector_store %arg8[%c48, %c0_31], %52 {strides = array<i32>} : memref<64x32xf32, #tpu.memory_space<vmem>>, vector<1x32xf32>,
    %c14 = arith.constant 14 : index
    %54 = memref.load %arg0[%c14] : memref<16xi32, #tpu.memory_space<smem>>
    %55 = arith.index_cast %54 : i32 to index
    %c0_32 = arith.constant 0 : index
    %56 = vector.load %arg1[%55, %c0_32] : memref<64x32xf32, #tpu.memory_space<vmem>>, vector<1x32xf32>
    %c49 = arith.constant 49 : index
    %c0_33 = arith.constant 0 : index
    %57 = vector.load %arg8[%c49, %c0_33] : memref<64x32xf32, #tpu.memory_space<vmem>>, vector<1x32xf32>
    tpu.vector_store %arg8[%c49, %c0_33], %56 {strides = array<i32>} : memref<64x32xf32, #tpu.memory_space<vmem>>, vector<1x32xf32>,
    %c7 = arith.constant 7 : index
    %58 = memref.load %arg0[%c7] : memref<16xi32, #tpu.memory_space<smem>>
    %59 = arith.index_cast %58 : i32 to index
    %c0_34 = arith.constant 0 : index
    %60 = vector.load %arg1[%59, %c0_34] : memref<64x32xf32, #tpu.memory_space<vmem>>, vector<1x32xf32>
    %c56 = arith.constant 56 : index
    %c0_35 = arith.constant 0 : index
    %61 = vector.load %arg8[%c56, %c0_35] : memref<64x32xf32, #tpu.memory_space<vmem>>, vector<1x32xf32>
    tpu.vector_store %arg8[%c56, %c0_35], %60 {strides = array<i32>} : memref<64x32xf32, #tpu.memory_space<vmem>>, vector<1x32xf32>,
    %c15 = arith.constant 15 : index
    %62 = memref.load %arg0[%c15] : memref<16xi32, #tpu.memory_space<smem>>
    %63 = arith.index_cast %62 : i32 to index
    %c0_36 = arith.constant 0 : index
    %64 = vector.load %arg1[%63, %c0_36] : memref<64x32xf32, #tpu.memory_space<vmem>>, vector<1x32xf32>
    %c57 = arith.constant 57 : index
    %c0_37 = arith.constant 0 : index
    %65 = vector.load %arg8[%c57, %c0_37] : memref<64x32xf32, #tpu.memory_space<vmem>>, vector<1x32xf32>
    tpu.vector_store %arg8[%c57, %c0_37], %64 {strides = array<i32>} : memref<64x32xf32, #tpu.memory_space<vmem>>, vector<1x32xf32>,
    %c0_38 = arith.constant 0 : index
    %c0_39 = arith.constant 0 : index
    %66 = vector.load %arg8[%c0_38, %c0_39] : memref<64x32xf32, #tpu.memory_space<vmem>>, vector<64x32xf32>
    %67 = arith.truncf %66 : vector<64x32xf32> to vector<64x32xbf16>
    %c0_40 = arith.constant 0 : index
    %c0_41 = arith.constant 0 : index
    %68 = vector.load %arg2[%c0_40, %c0_41] : memref<32x128xbf16, #tpu.memory_space<vmem>>, vector<32x128xbf16>
    %cst_42 = arith.constant dense<0.000000e+00> : vector<64x128xf32>
    %69 = tpu.matmul %67, %68, %cst_42 {dimension_numbers = #tpu.dot_dimension_numbers<[1], [0], [0], [1], [0, 0, 1, 1], [], []>} : vector<64x32xbf16>, vector<32x128xbf16>, vector<64x128xf32> -> vector<64x128xf32>
    %c0_43 = arith.constant 0 : index
    %c0_44 = arith.constant 0 : index
    %70 = vector.load %arg4[%c0_43, %c0_44] : memref<1x128xf32, #tpu.memory_space<vmem>>, vector<1x128xf32>
    %71 = vector.broadcast %70 : vector<1x128xf32> to vector<64x128xf32>
    %72 = arith.addf %69, %71 : vector<64x128xf32>
    %c0_45 = arith.constant 0 : index
    %c0_46 = arith.constant 0 : index
    %73 = vector.load %arg3[%c0_45, %c0_46] : memref<32x128xbf16, #tpu.memory_space<vmem>>, vector<32x128xbf16>
    %c0_47 = arith.constant 0 : index
    %c0_48 = arith.constant 0 : index
    %74 = vector.load %arg5[%c0_47, %c0_48] : memref<32x4xbf16, #tpu.memory_space<vmem>>, vector<32x4xbf16>
    %cst_49 = arith.constant 0.000000e+00 : f32
    %75 = vector.broadcast %cst_49 : f32 to vector<8x32xf32>
    %cst_50 = arith.constant 0.000000e+00 : f32
    %76 = vector.broadcast %cst_50 : f32 to vector<8x32xf32>
    %77 = vector.extract_strided_slice %72 {offsets = [0, 0], sizes = [8, 128], strides = [1, 1]} : vector<64x128xf32> to vector<8x128xf32>
    %78 = arith.truncf %75 : vector<8x32xf32> to vector<8x32xbf16>
    %cst_51 = arith.constant dense<0.000000e+00> : vector<8x128xf32>
    %79 = tpu.matmul %78, %73, %cst_51 {dimension_numbers = #tpu.dot_dimension_numbers<[1], [0], [0], [1], [0, 0, 1, 1], [], []>} : vector<8x32xbf16>, vector<32x128xbf16>, vector<8x128xf32> -> vector<8x128xf32>
    %80 = arith.addf %77, %79 : vector<8x128xf32>
    %81 = arith.negf %80 : vector<8x128xf32>
    %82 = math.exp %81 : vector<8x128xf32>
    %cst_52 = arith.constant 1.000000e+00 : f32
    %83 = vector.broadcast %cst_52 : f32 to vector<8x128xf32>
    %84 = arith.addf %83, %82 : vector<8x128xf32>
    %85 = arith.divf %83, %84 : vector<8x128xf32>
    %86 = vector.extract_strided_slice %85 {offsets = [0, 0], sizes = [8, 32], strides = [1, 1]} : vector<8x128xf32> to vector<8x32xf32>
    %87 = vector.extract_strided_slice %85 {offsets = [0, 32], sizes = [8, 32], strides = [1, 1]} : vector<8x128xf32> to vector<8x32xf32>
    %88 = vector.extract_strided_slice %85 {offsets = [0, 96], sizes = [8, 32], strides = [1, 1]} : vector<8x128xf32> to vector<8x32xf32>
    %89 = vector.extract_strided_slice %80 {offsets = [0, 64], sizes = [8, 32], strides = [1, 1]} : vector<8x128xf32> to vector<8x32xf32>
    %90 = math.tanh %89 : vector<8x32xf32>
    %91 = arith.mulf %87, %76 : vector<8x32xf32>
    %92 = arith.mulf %86, %90 : vector<8x32xf32>
    %93 = arith.addf %91, %92 : vector<8x32xf32>
    %94 = math.tanh %93 : vector<8x32xf32>
    %95 = arith.mulf %88, %94 : vector<8x32xf32>
    %96 = vector.extract_strided_slice %72 {offsets = [8, 0], sizes = [8, 128], strides = [1, 1]} : vector<64x128xf32> to vector<8x128xf32>
    %97 = arith.truncf %95 : vector<8x32xf32> to vector<8x32xbf16>
    %cst_53 = arith.constant dense<0.000000e+00> : vector<8x128xf32>
    %98 = tpu.matmul %97, %73, %cst_53 {dimension_numbers = #tpu.dot_dimension_numbers<[1], [0], [0], [1], [0, 0, 1, 1], [], []>} : vector<8x32xbf16>, vector<32x128xbf16>, vector<8x128xf32> -> vector<8x128xf32>
    %99 = arith.addf %96, %98 : vector<8x128xf32>
    %100 = arith.negf %99 : vector<8x128xf32>
    %101 = math.exp %100 : vector<8x128xf32>
    %cst_54 = arith.constant 1.000000e+00 : f32
    %102 = vector.broadcast %cst_54 : f32 to vector<8x128xf32>
    %103 = arith.addf %102, %101 : vector<8x128xf32>
    %104 = arith.divf %102, %103 : vector<8x128xf32>
    %105 = vector.extract_strided_slice %104 {offsets = [0, 0], sizes = [8, 32], strides = [1, 1]} : vector<8x128xf32> to vector<8x32xf32>
    %106 = vector.extract_strided_slice %104 {offsets = [0, 32], sizes = [8, 32], strides = [1, 1]} : vector<8x128xf32> to vector<8x32xf32>
    %107 = vector.extract_strided_slice %104 {offsets = [0, 96], sizes = [8, 32], strides = [1, 1]} : vector<8x128xf32> to vector<8x32xf32>
    %108 = vector.extract_strided_slice %99 {offsets = [0, 64], sizes = [8, 32], strides = [1, 1]} : vector<8x128xf32> to vector<8x32xf32>
    %109 = math.tanh %108 : vector<8x32xf32>
    %110 = arith.mulf %106, %93 : vector<8x32xf32>
    %111 = arith.mulf %105, %109 : vector<8x32xf32>
    %112 = arith.addf %110, %111 : vector<8x32xf32>
    %113 = math.tanh %112 : vector<8x32xf32>
    %114 = arith.mulf %107, %113 : vector<8x32xf32>
    %115 = vector.extract_strided_slice %72 {offsets = [16, 0], sizes = [8, 128], strides = [1, 1]} : vector<64x128xf32> to vector<8x128xf32>
    %116 = arith.truncf %114 : vector<8x32xf32> to vector<8x32xbf16>
    %cst_55 = arith.constant dense<0.000000e+00> : vector<8x128xf32>
    %117 = tpu.matmul %116, %73, %cst_55 {dimension_numbers = #tpu.dot_dimension_numbers<[1], [0], [0], [1], [0, 0, 1, 1], [], []>} : vector<8x32xbf16>, vector<32x128xbf16>, vector<8x128xf32> -> vector<8x128xf32>
    %118 = arith.addf %115, %117 : vector<8x128xf32>
    %119 = arith.negf %118 : vector<8x128xf32>
    %120 = math.exp %119 : vector<8x128xf32>
    %cst_56 = arith.constant 1.000000e+00 : f32
    %121 = vector.broadcast %cst_56 : f32 to vector<8x128xf32>
    %122 = arith.addf %121, %120 : vector<8x128xf32>
    %123 = arith.divf %121, %122 : vector<8x128xf32>
    %124 = vector.extract_strided_slice %123 {offsets = [0, 0], sizes = [8, 32], strides = [1, 1]} : vector<8x128xf32> to vector<8x32xf32>
    %125 = vector.extract_strided_slice %123 {offsets = [0, 32], sizes = [8, 32], strides = [1, 1]} : vector<8x128xf32> to vector<8x32xf32>
    %126 = vector.extract_strided_slice %123 {offsets = [0, 96], sizes = [8, 32], strides = [1, 1]} : vector<8x128xf32> to vector<8x32xf32>
    %127 = vector.extract_strided_slice %118 {offsets = [0, 64], sizes = [8, 32], strides = [1, 1]} : vector<8x128xf32> to vector<8x32xf32>
    %128 = math.tanh %127 : vector<8x32xf32>
    %129 = arith.mulf %125, %112 : vector<8x32xf32>
    %130 = arith.mulf %124, %128 : vector<8x32xf32>
    %131 = arith.addf %129, %130 : vector<8x32xf32>
    %132 = math.tanh %131 : vector<8x32xf32>
    %133 = arith.mulf %126, %132 : vector<8x32xf32>
    %134 = vector.extract_strided_slice %72 {offsets = [24, 0], sizes = [8, 128], strides = [1, 1]} : vector<64x128xf32> to vector<8x128xf32>
    %135 = arith.truncf %133 : vector<8x32xf32> to vector<8x32xbf16>
    %cst_57 = arith.constant dense<0.000000e+00> : vector<8x128xf32>
    %136 = tpu.matmul %135, %73, %cst_57 {dimension_numbers = #tpu.dot_dimension_numbers<[1], [0], [0], [1], [0, 0, 1, 1], [], []>} : vector<8x32xbf16>, vector<32x128xbf16>, vector<8x128xf32> -> vector<8x128xf32>
    %137 = arith.addf %134, %136 : vector<8x128xf32>
    %138 = arith.negf %137 : vector<8x128xf32>
    %139 = math.exp %138 : vector<8x128xf32>
    %cst_58 = arith.constant 1.000000e+00 : f32
    %140 = vector.broadcast %cst_58 : f32 to vector<8x128xf32>
    %141 = arith.addf %140, %139 : vector<8x128xf32>
    %142 = arith.divf %140, %141 : vector<8x128xf32>
    %143 = vector.extract_strided_slice %142 {offsets = [0, 0], sizes = [8, 32], strides = [1, 1]} : vector<8x128xf32> to vector<8x32xf32>
    %144 = vector.extract_strided_slice %142 {offsets = [0, 32], sizes = [8, 32], strides = [1, 1]} : vector<8x128xf32> to vector<8x32xf32>
    %145 = vector.extract_strided_slice %142 {offsets = [0, 96], sizes = [8, 32], strides = [1, 1]} : vector<8x128xf32> to vector<8x32xf32>
    %146 = vector.extract_strided_slice %137 {offsets = [0, 64], sizes = [8, 32], strides = [1, 1]} : vector<8x128xf32> to vector<8x32xf32>
    %147 = math.tanh %146 : vector<8x32xf32>
    %148 = arith.mulf %144, %131 : vector<8x32xf32>
    %149 = arith.mulf %143, %147 : vector<8x32xf32>
    %150 = arith.addf %148, %149 : vector<8x32xf32>
    %151 = math.tanh %150 : vector<8x32xf32>
    %152 = arith.mulf %145, %151 : vector<8x32xf32>
    %153 = vector.extract_strided_slice %72 {offsets = [32, 0], sizes = [8, 128], strides = [1, 1]} : vector<64x128xf32> to vector<8x128xf32>
    %154 = arith.truncf %152 : vector<8x32xf32> to vector<8x32xbf16>
    %cst_59 = arith.constant dense<0.000000e+00> : vector<8x128xf32>
    %155 = tpu.matmul %154, %73, %cst_59 {dimension_numbers = #tpu.dot_dimension_numbers<[1], [0], [0], [1], [0, 0, 1, 1], [], []>} : vector<8x32xbf16>, vector<32x128xbf16>, vector<8x128xf32> -> vector<8x128xf32>
    %156 = arith.addf %153, %155 : vector<8x128xf32>
    %157 = arith.negf %156 : vector<8x128xf32>
    %158 = math.exp %157 : vector<8x128xf32>
    %cst_60 = arith.constant 1.000000e+00 : f32
    %159 = vector.broadcast %cst_60 : f32 to vector<8x128xf32>
    %160 = arith.addf %159, %158 : vector<8x128xf32>
    %161 = arith.divf %159, %160 : vector<8x128xf32>
    %162 = vector.extract_strided_slice %161 {offsets = [0, 0], sizes = [8, 32], strides = [1, 1]} : vector<8x128xf32> to vector<8x32xf32>
    %163 = vector.extract_strided_slice %161 {offsets = [0, 32], sizes = [8, 32], strides = [1, 1]} : vector<8x128xf32> to vector<8x32xf32>
    %164 = vector.extract_strided_slice %161 {offsets = [0, 96], sizes = [8, 32], strides = [1, 1]} : vector<8x128xf32> to vector<8x32xf32>
    %165 = vector.extract_strided_slice %156 {offsets = [0, 64], sizes = [8, 32], strides = [1, 1]} : vector<8x128xf32> to vector<8x32xf32>
    %166 = math.tanh %165 : vector<8x32xf32>
    %167 = arith.mulf %163, %150 : vector<8x32xf32>
    %168 = arith.mulf %162, %166 : vector<8x32xf32>
    %169 = arith.addf %167, %168 : vector<8x32xf32>
    %170 = math.tanh %169 : vector<8x32xf32>
    %171 = arith.mulf %164, %170 : vector<8x32xf32>
    %172 = vector.extract_strided_slice %72 {offsets = [40, 0], sizes = [8, 128], strides = [1, 1]} : vector<64x128xf32> to vector<8x128xf32>
    %173 = arith.truncf %171 : vector<8x32xf32> to vector<8x32xbf16>
    %cst_61 = arith.constant dense<0.000000e+00> : vector<8x128xf32>
    %174 = tpu.matmul %173, %73, %cst_61 {dimension_numbers = #tpu.dot_dimension_numbers<[1], [0], [0], [1], [0, 0, 1, 1], [], []>} : vector<8x32xbf16>, vector<32x128xbf16>, vector<8x128xf32> -> vector<8x128xf32>
    %175 = arith.addf %172, %174 : vector<8x128xf32>
    %176 = arith.negf %175 : vector<8x128xf32>
    %177 = math.exp %176 : vector<8x128xf32>
    %cst_62 = arith.constant 1.000000e+00 : f32
    %178 = vector.broadcast %cst_62 : f32 to vector<8x128xf32>
    %179 = arith.addf %178, %177 : vector<8x128xf32>
    %180 = arith.divf %178, %179 : vector<8x128xf32>
    %181 = vector.extract_strided_slice %180 {offsets = [0, 0], sizes = [8, 32], strides = [1, 1]} : vector<8x128xf32> to vector<8x32xf32>
    %182 = vector.extract_strided_slice %180 {offsets = [0, 32], sizes = [8, 32], strides = [1, 1]} : vector<8x128xf32> to vector<8x32xf32>
    %183 = vector.extract_strided_slice %180 {offsets = [0, 96], sizes = [8, 32], strides = [1, 1]} : vector<8x128xf32> to vector<8x32xf32>
    %184 = vector.extract_strided_slice %175 {offsets = [0, 64], sizes = [8, 32], strides = [1, 1]} : vector<8x128xf32> to vector<8x32xf32>
    %185 = math.tanh %184 : vector<8x32xf32>
    %186 = arith.mulf %182, %169 : vector<8x32xf32>
    %187 = arith.mulf %181, %185 : vector<8x32xf32>
    %188 = arith.addf %186, %187 : vector<8x32xf32>
    %189 = math.tanh %188 : vector<8x32xf32>
    %190 = arith.mulf %183, %189 : vector<8x32xf32>
    %191 = vector.extract_strided_slice %72 {offsets = [48, 0], sizes = [8, 128], strides = [1, 1]} : vector<64x128xf32> to vector<8x128xf32>
    %192 = arith.truncf %190 : vector<8x32xf32> to vector<8x32xbf16>
    %cst_63 = arith.constant dense<0.000000e+00> : vector<8x128xf32>
    %193 = tpu.matmul %192, %73, %cst_63 {dimension_numbers = #tpu.dot_dimension_numbers<[1], [0], [0], [1], [0, 0, 1, 1], [], []>} : vector<8x32xbf16>, vector<32x128xbf16>, vector<8x128xf32> -> vector<8x128xf32>
    %194 = arith.addf %191, %193 : vector<8x128xf32>
    %195 = arith.negf %194 : vector<8x128xf32>
    %196 = math.exp %195 : vector<8x128xf32>
    %cst_64 = arith.constant 1.000000e+00 : f32
    %197 = vector.broadcast %cst_64 : f32 to vector<8x128xf32>
    %198 = arith.addf %197, %196 : vector<8x128xf32>
    %199 = arith.divf %197, %198 : vector<8x128xf32>
    %200 = vector.extract_strided_slice %199 {offsets = [0, 0], sizes = [8, 32], strides = [1, 1]} : vector<8x128xf32> to vector<8x32xf32>
    %201 = vector.extract_strided_slice %199 {offsets = [0, 32], sizes = [8, 32], strides = [1, 1]} : vector<8x128xf32> to vector<8x32xf32>
    %202 = vector.extract_strided_slice %199 {offsets = [0, 96], sizes = [8, 32], strides = [1, 1]} : vector<8x128xf32> to vector<8x32xf32>
    %203 = vector.extract_strided_slice %194 {offsets = [0, 64], sizes = [8, 32], strides = [1, 1]} : vector<8x128xf32> to vector<8x32xf32>
    %204 = math.tanh %203 : vector<8x32xf32>
    %205 = arith.mulf %201, %188 : vector<8x32xf32>
    %206 = arith.mulf %200, %204 : vector<8x32xf32>
    %207 = arith.addf %205, %206 : vector<8x32xf32>
    %208 = math.tanh %207 : vector<8x32xf32>
    %209 = arith.mulf %202, %208 : vector<8x32xf32>
    %210 = vector.extract_strided_slice %72 {offsets = [56, 0], sizes = [8, 128], strides = [1, 1]} : vector<64x128xf32> to vector<8x128xf32>
    %211 = arith.truncf %209 : vector<8x32xf32> to vector<8x32xbf16>
    %cst_65 = arith.constant dense<0.000000e+00> : vector<8x128xf32>
    %212 = tpu.matmul %211, %73, %cst_65 {dimension_numbers = #tpu.dot_dimension_numbers<[1], [0], [0], [1], [0, 0, 1, 1], [], []>} : vector<8x32xbf16>, vector<32x128xbf16>, vector<8x128xf32> -> vector<8x128xf32>
    %213 = arith.addf %210, %212 : vector<8x128xf32>
    %214 = arith.negf %213 : vector<8x128xf32>
    %215 = math.exp %214 : vector<8x128xf32>
    %cst_66 = arith.constant 1.000000e+00 : f32
    %216 = vector.broadcast %cst_66 : f32 to vector<8x128xf32>
    %217 = arith.addf %216, %215 : vector<8x128xf32>
    %218 = arith.divf %216, %217 : vector<8x128xf32>
    %219 = vector.extract_strided_slice %218 {offsets = [0, 0], sizes = [8, 32], strides = [1, 1]} : vector<8x128xf32> to vector<8x32xf32>
    %220 = vector.extract_strided_slice %218 {offsets = [0, 32], sizes = [8, 32], strides = [1, 1]} : vector<8x128xf32> to vector<8x32xf32>
    %221 = vector.extract_strided_slice %218 {offsets = [0, 96], sizes = [8, 32], strides = [1, 1]} : vector<8x128xf32> to vector<8x32xf32>
    %222 = vector.extract_strided_slice %213 {offsets = [0, 64], sizes = [8, 32], strides = [1, 1]} : vector<8x128xf32> to vector<8x32xf32>
    %223 = math.tanh %222 : vector<8x32xf32>
    %224 = arith.mulf %220, %207 : vector<8x32xf32>
    %225 = arith.mulf %219, %223 : vector<8x32xf32>
    %226 = arith.addf %224, %225 : vector<8x32xf32>
    %227 = math.tanh %226 : vector<8x32xf32>
    %228 = arith.mulf %221, %227 : vector<8x32xf32>
    %229 = arith.truncf %228 : vector<8x32xf32> to vector<8x32xbf16>
    %cst_67 = arith.constant dense<0.000000e+00> : vector<8x4xf32>
    %230 = tpu.matmul %229, %74, %cst_67 {dimension_numbers = #tpu.dot_dimension_numbers<[1], [0], [0], [1], [0, 0, 1, 1], [], []>} : vector<8x32xbf16>, vector<32x4xbf16>, vector<8x4xf32> -> vector<8x4xf32>
    %c0_68 = arith.constant 0 : index
    %c0_69 = arith.constant 0 : index
    %231 = vector.load %arg6[%c0_68, %c0_69] : memref<1x4xf32, #tpu.memory_space<vmem>>, vector<1x4xf32>
    %232 = vector.broadcast %231 : vector<1x4xf32> to vector<8x4xf32>
    %233 = arith.addf %230, %232 : vector<8x4xf32>
    %c0_70 = arith.constant 0 : index
    %c0_71 = arith.constant 0 : index
    %234 = vector.load %arg7[%c0_70, %c0_71] : memref<8x4xf32, #tpu.memory_space<vmem>>, vector<8x4xf32>
    tpu.vector_store %arg7[%c0_70, %c0_71], %233 {strides = array<i32>} : memref<8x4xf32, #tpu.memory_space<vmem>>, vector<8x4xf32>,
    return
  }
}

</mosaic_0001>

<llo_original>
// kernel: french_sentiment_forward.1
$region0: #{french_sentiment_forward.1}
  #allocation0 [shape = 'u32[]', space=smem, size = 0x4, offset = 0x4, fixed_abs, tag = 'smem constant byte address 0x4 - core index']
  #allocation1 [shape = 'u32[144,128]{1,0:T(1,128)}', space=vmem, size = 0x12000, scoped, tag = 'internal scratch']
  #allocation2 [shape = 'f32[64,32]{1,0:T(8,128)}', space=vmem, size = 0x8000, scoped, tag = 'scratch operand']
  %s0 = inlined_call_operand.vmem [shape: s32[16], index: 0, kind: input, shape index: {}]
  %s1 = inlined_call_operand.vmem [shape: f32[64,32], index: 1, kind: input, shape index: {}]
  %s2 = inlined_call_operand.vmem [shape: bf16[32,128], index: 2, kind: input, shape index: {}]
  %s3 = inlined_call_operand.vmem [shape: bf16[32,128], index: 3, kind: input, shape index: {}]
  %s4 = inlined_call_operand.vmem [shape: f32[1,128], index: 4, kind: input, shape index: {}]
  %s5 = inlined_call_operand.vmem [shape: bf16[32,4], index: 5, kind: input, shape index: {}]
  %s6 = inlined_call_operand.vmem [shape: f32[1,4], index: 6, kind: input, shape index: {}]
  %s7 = inlined_call_operand.vmem [shape: f32[8,4], index: 7, kind: output, shape index: {}]
  %s8 = sld [smem:[#allocation0]]
  $region42: #{french_sentiment_forward.1} parent=0
    _
  %s10 = ssub.s32 1, %s8
  %s11 = scalar_select 0, %s10, %s8
  $region1: #{french_sentiment_forward.1} parent=0
    #allocation3 [shape = 'u8[512]{0}', space=smem, size = 0x200, scoped, tag = 'input window, operand 0, single buffered']
    #allocation4 [shape = 's32[1]{0}', space=sflag, size = 0x4, scoped, tag = 'scoped memory for french_sentiment_forward.1']
    %12 = vsyncpa [#allocation4], 0
    // Predicated region
    $region2: #{french_sentiment_forward.1} parent=1 // pred_check
      _
    $region3: #{french_sentiment_forward.1} parent=1 // pred_check_branch
      %14 = sbr.rel (0) target = $region5
    $region4: #{french_sentiment_forward.1} parent=1 // pred_region
      %s16 = ssub.s32 16, 16
      %17 = vsyncadd [#allocation4], %s16
      %s19 = sshll.u32 %s0, 4
      %s20 = int_to_ptr.vmem [resolvable:$true] %s19
      %22 = dma.vmem_to_smem %s20, 16, [#allocation3], [#allocation4]
    $region5: #{french_sentiment_forward.1} parent=1 // pred_fallthru
      _
    // Predicated region
    $region6: #{french_sentiment_forward.1} parent=1 // pred_check
      _
    $region7: #{french_sentiment_forward.1} parent=1 // pred_check_branch
      %24 = sbr.rel (0) target = $region9
    $region8: #{french_sentiment_forward.1} parent=1 // pred_region
      _
    $region9: #{french_sentiment_forward.1} parent=1 // pred_fallthru
      _
    // Predicated region
    $region10: #{french_sentiment_forward.1} parent=1 // pred_check
      _
    $region11: #{french_sentiment_forward.1} parent=1 // pred_check_branch
      %26 = sbr.rel (0) target = $region13
    $region12: #{french_sentiment_forward.1} parent=1 // pred_region
      _
    $region13: #{french_sentiment_forward.1} parent=1 // pred_fallthru
      _
    // Predicated region
    $region14: #{french_sentiment_forward.1} parent=1 // pred_check
      _
    $region15: #{french_sentiment_forward.1} parent=1 // pred_check_branch
      %28 = sbr.rel (0) target = $region17
    $region16: #{french_sentiment_forward.1} parent=1 // pred_region
      _
    $region17: #{french_sentiment_forward.1} parent=1 // pred_fallthru
      _
    // Predicated region
    $region18: #{french_sentiment_forward.1} parent=1 // pred_check
      _
    $region19: #{french_sentiment_forward.1} parent=1 // pred_check_branch
      %30 = sbr.rel (0) target = $region21
    $region20: #{french_sentiment_forward.1} parent=1 // pred_region
      _
    $region21: #{french_sentiment_forward.1} parent=1 // pred_fallthru
      _
    // Predicated region
    $region22: #{french_sentiment_forward.1} parent=1 // pred_check
      _
    $region23: #{french_sentiment_forward.1} parent=1 // pred_check_branch
      %32 = sbr.rel (0) target = $region25
    $region24: #{french_sentiment_forward.1} parent=1 // pred_region
      _
    $region25: #{french_sentiment_forward.1} parent=1 // pred_fallthru
      _
    // Predicated region
    $region26: #{french_sentiment_forward.1} parent=1 // pred_check
      _
    $region27: #{french_sentiment_forward.1} parent=1 // pred_check_branch
      %34 = sbr.rel (0) target = $region29
    $region28: #{french_sentiment_forward.1} parent=1 // pred_region
      _
    $region29: #{french_sentiment_forward.1} parent=1 // pred_fallthru
      _
    // Predicated region
    $region30: #{french_sentiment_forward.1} parent=1 // pred_check
      _
    $region31: #{french_sentiment_forward.1} parent=1 // pred_check_branch
      %36 = sbr.rel (0) target = $region33
    $region32: #{french_sentiment_forward.1} parent=1 // pred_region
      %37 = dma.done [#allocation4], 16
    $region33: #{french_sentiment_forward.1} parent=1 // pred_fallthru
      _
    %38 = sfence
    %vm40 = vcmask 261120
    %41 = vst.msk [vmem:[#allocation2] sm:$0xff] %vm40, 0.0
    %42 = vst.msk [vmem:[#allocation2 + $0x8] sm:$0xff] %vm40, 0.0
    %43 = vst.msk [vmem:[#allocation2 + $0x10] sm:$0xff] %vm40, 0.0
    %44 = vst.msk [vmem:[#allocation2 + $0x18] sm:$0xff] %vm40, 0.0
    %45 = vst.msk [vmem:[#allocation2 + $0x20] sm:$0xff] %vm40, 0.0
    %46 = vst.msk [vmem:[#allocation2 + $0x28] sm:$0xff] %vm40, 0.0
    %47 = vst.msk [vmem:[#allocation2 + $0x30] sm:$0xff] %vm40, 0.0
    %48 = vst.msk [vmem:[#allocation2 + $0x38] sm:$0xff] %vm40, 0.0
    %s49 = sld [smem:[#allocation3]]
    %s50 = scalar_lea.vmem %s1, %s49
    %v51 = vld [vmem:[%s50] sm:$0x1]
    %vm52 = vcmask 253952
    %53 = vst.msk [vmem:[#allocation2] sm:$0x1] %vm52, %v51
    %s54 = sld [smem:[#allocation3 + $0x8]]
    %s55 = scalar_lea.vmem %s1, %s54
    %v56 = vld [vmem:[%s55] sm:$0x1]
    %57 = vst.msk [vmem:[#allocation2 + $0x1] sm:$0x1] %vm52, %v56
    %s58 = sld [smem:[#allocation3 + $0x1]]
    %s59 = scalar_lea.vmem %s1, %s58
    %v60 = vld [vmem:[%s59] sm:$0x1]
    %61 = vst.msk [vmem:[#allocation2 + $0x8] sm:$0x1] %vm52, %v60
    %s62 = sld [smem:[#allocation3 + $0x9]]
    %s63 = scalar_lea.vmem %s1, %s62
    %v64 = vld [vmem:[%s63] sm:$0x1]
    %65 = vst.msk [vmem:[#allocation2 + $0x9] sm:$0x1] %vm52, %v64
    %s66 = sld [smem:[#allocation3 + $0x2]]
    %s67 = scalar_lea.vmem %s1, %s66
    %v68 = vld [vmem:[%s67] sm:$0x1]
    %69 = vst.msk [vmem:[#allocation2 + $0x10] sm:$0x1] %vm52, %v68
    %s70 = sld [smem:[#allocation3 + $0xa]]
    %s71 = scalar_lea.vmem %s1, %s70
    %v72 = vld [vmem:[%s71] sm:$0x1]
    %73 = vst.msk [vmem:[#allocation2 + $0x11] sm:$0x1] %vm52, %v72
    %s74 = sld [smem:[#allocation3 + $0x3]]
    %s75 = scalar_lea.vmem %s1, %s74
    %v76 = vld [vmem:[%s75] sm:$0x1]
    %77 = vst.msk [vmem:[#allocation2 + $0x18] sm:$0x1] %vm52, %v76
    %s78 = sld [smem:[#allocation3 + $0xb]]
    %s79 = scalar_lea.vmem %s1, %s78
    %v80 = vld [vmem:[%s79] sm:$0x1]
    %81 = vst.msk [vmem:[#allocation2 + $0x19] sm:$0x1] %vm52, %v80
    %s82 = sld [smem:[#allocation3 + $0x4]]
    %s83 = scalar_lea.vmem %s1, %s82
    %v84 = vld [vmem:[%s83] sm:$0x1]
    %85 = vst.msk [vmem:[#allocation2 + $0x20] sm:$0x1] %vm52, %v84
    %s86 = sld [smem:[#allocation3 + $0xc]]
    %s87 = scalar_lea.vmem %s1, %s86
    %v88 = vld [vmem:[%s87] sm:$0x1]
    %89 = vst.msk [vmem:[#allocation2 + $0x21] sm:$0x1] %vm52, %v88
    %s90 = sld [smem:[#allocation3 + $0x5]]
    %s91 = scalar_lea.vmem %s1, %s90
    %v92 = vld [vmem:[%s91] sm:$0x1]
    %93 = vst.msk [vmem:[#allocation2 + $0x28] sm:$0x1] %vm52, %v92
    %s94 = sld [smem:[#allocation3 + $0xd]]
    %s95 = scalar_lea.vmem %s1, %s94
    %v96 = vld [vmem:[%s95] sm:$0x1]
    %97 = vst.msk [vmem:[#allocation2 + $0x29] sm:$0x1] %vm52, %v96
    %s98 = sld [smem:[#allocation3 + $0x6]]
    %s99 = scalar_lea.vmem %s1, %s98
    %v100 = vld [vmem:[%s99] sm:$0x1]
    %101 = vst.msk [vmem:[#allocation2 + $0x30] sm:$0x1] %vm52, %v100
    %s102 = sld [smem:[#allocation3 + $0xe]]
    %s103 = scalar_lea.vmem %s1, %s102
    %v104 = vld [vmem:[%s103] sm:$0x1]
    %105 = vst.msk [vmem:[#allocation2 + $0x31] sm:$0x1] %vm52, %v104
    %s106 = sld [smem:[#allocation3 + $0x7]]
    %s107 = scalar_lea.vmem %s1, %s106
    %v108 = vld [vmem:[%s107] sm:$0x1]
    %109 = vst.msk [vmem:[#allocation2 + $0x38] sm:$0x1] %vm52, %v108
    %s110 = sld [smem:[#allocation3 + $0xf]]
    %s111 = scalar_lea.vmem %s1, %s110
    %v112 = vld [vmem:[%s111] sm:$0x1]
    %113 = vst.msk [vmem:[#allocation2 + $0x39] sm:$0x1] %vm52, %v112
    %v114 = vld [vmem:[#allocation2] sm:$0xff]
    %v115 = vld [vmem:[#allocation2 + $0x8] sm:$0xff]
    %v116 = vld [vmem:[#allocation2 + $0x10] sm:$0xff]
    %v117 = vld [vmem:[#allocation2 + $0x18] sm:$0xff]
    %v118 = vld [vmem:[#allocation2 + $0x20] sm:$0xff]
    %v119 = vld [vmem:[#allocation2 + $0x28] sm:$0xff]
    %v120 = vld [vmem:[#allocation2 + $0x30] sm:$0xff]
    %v121 = vld [vmem:[#allocation2 + $0x38] sm:$0xff]
    %v122 = vpack.c.bf16 %v115, %v114
    %v123 = vpack.c.bf16 %v117, %v116
    %v124 = vpack.c.bf16 %v119, %v118
    %v125 = vpack.c.bf16 %v121, %v120
    %v126 = vld [vmem:[%s2] sm:$0xf]
    %v127 = vld [vmem:[%s2 + $0x4] sm:$0xf]
    %v128 = vld [vmem:[%s2 + $0x8] sm:$0xf]
    %v129 = vld [vmem:[%s2 + $0xc] sm:$0xf]
    %v130 = vld [vmem:[%s4] sm:$0x1]
    %v132 = vlaneseq
    %v133 = vshrl.u32 %v132, 7
    %v134 = vsub.s32 0, %v133
    %v135 = vrot.slane %v130, %v134
    %v141 = vunpack.c.l.b16 %v126
    %v142 = vunpack.c.l.b16 %v127
    %v143 = vunpack.c.l.b16 %v128
    %v144 = vunpack.c.l.b16 %v129
    %v145 = vpack.c.b16 %v142, %v141
    %v146 = vpack.c.b16 %v144, %v143
    %v150 = vsel %vm40, %v122, 0
    %v153 = vsel %vm40, %v123, 0
    %v156 = vsel %vm40, %v124, 0
    %v159 = vsel %vm40, %v125, 0
    %161 = vmatprep.subr.bf16.mxu0 0
    %162 = vmatpush1.bf16.msra.mxu0 0
    %163 = vmatprep.subr.bf16.mxu0 0
    %164 = vmatpush1.bf16.msra.mxu0 0
    %165 = vmatprep.subr.bf16.mxu0 0
    %166 = vmatpush1.bf16.msra.mxu0 0
    %167 = vmatprep.subr.bf16.mxu0 0
    %168 = vmatpush1.bf16.msra.mxu0 0
    %169 = vmatprep.subr.bf16.mxu0 0
    %170 = vmatpush1.bf16.msra.mxu0 0
    %171 = vmatprep.subr.bf16.mxu0 0
    %172 = vmatpush1.bf16.msra.mxu0 0
    %173 = vmatprep.subr.bf16.mxu0 0
    %174 = vmatpush1.bf16.msra.mxu0 %v146
    %175 = vmatprep.subr.bf16.mxu0 0
    %176 = vmatpush1.bf16.msra.mxu0 %v145
    %177 = vmatprep.subr.bf16.mxu0 0
    %178 = vmatpush2.bf16.msra.mxu0 0
    %179 = vmatprep.subr.bf16.mxu0 0
    %180 = vmatpush2.bf16.msra.mxu0 0
    %181 = vmatprep.subr.bf16.mxu0 0
    %182 = vmatpush2.bf16.msra.mxu0 0
    %183 = vmatprep.subr.bf16.mxu0 0
    %184 = vmatpush2.bf16.msra.mxu0 0
    %185 = vmatprep.subr.bf16.mxu0 0
    %186 = vmatpush2.bf16.msra.mxu0 0
    %187 = vmatprep.subr.bf16.mxu0 0
    %188 = vmatpush2.bf16.msra.mxu0 0
    %189 = vmatprep.subr.bf16.mxu0 0
    %190 = vmatpush2.bf16.msra.mxu0 0
    %191 = vmatprep.subr.bf16.mxu0 0
    %192 = vmatpush2.bf16.msra.mxu0 0
    %193 = vmatprep.mubr.bf16.mxu0 0
    %194 = vmatmul.mubr.bf16.gmra.mxu0 %v150
    %v195 = vpop.f32.mrf.mxu0
    %v196 = vadd.f32 %v135, %v195
    %v197 = vpop.f32.mrf.mxu0
    %v198 = vpop.f32.mrf.mxu0
    %v199 = vadd.f32 %v135, %v198
    %v200 = vpop.f32.mrf.mxu0
    %201 = vmatprep.mubr.bf16.mxu0 0
    %202 = vmatmul.mubr.bf16.gmra.mxu0 %v153
    %v203 = vpop.f32.mrf.mxu0
    %v204 = vadd.f32 %v135, %v203
    %v205 = vpop.f32.mrf.mxu0
    %v206 = vpop.f32.mrf.mxu0
    %v207 = vadd.f32 %v135, %v206
    %v208 = vpop.f32.mrf.mxu0
    %209 = vmatprep.mubr.bf16.mxu0 0
    %210 = vmatmul.mubr.bf16.gmra.mxu0 %v156
    %v211 = vpop.f32.mrf.mxu0
    %v212 = vadd.f32 %v135, %v211
    %v213 = vpop.f32.mrf.mxu0
    %v214 = vpop.f32.mrf.mxu0
    %v215 = vadd.f32 %v135, %v214
    %v216 = vpop.f32.mrf.mxu0
    %217 = vmatprep.mubr.bf16.mxu0 0
    %218 = vmatmul.mubr.bf16.gmra.mxu0 %v159
    %v219 = vpop.f32.mrf.mxu0
    %v220 = vadd.f32 %v135, %v219
    %v221 = vpop.f32.mrf.mxu0
    %v222 = vpop.f32.mrf.mxu0
    %v223 = vadd.f32 %v135, %v222
    %v224 = vpop.f32.mrf.mxu0
    %225 = vdwg.mxu0
    %v226 = vld [vmem:[%s3] sm:$0xf]
    %v227 = vld [vmem:[%s3 + $0x4] sm:$0xf]
    %v228 = vld [vmem:[%s3 + $0x8] sm:$0xf]
    %v229 = vld [vmem:[%s3 + $0xc] sm:$0xf]
    %v230 = vld [vmem:[%s5] sm:$0xf]
    %v231 = vld [vmem:[%s5 + $0x4] sm:$0xf]
    %v232 = vld [vmem:[%s5 + $0x8] sm:$0xf]
    %v233 = vld [vmem:[%s5 + $0xc] sm:$0xf]
    %v238 = vunpack.c.l.b16 %v226
    %v239 = vunpack.c.l.b16 %v227
    %v240 = vunpack.c.l.b16 %v228
    %v241 = vunpack.c.l.b16 %v229
    %v242 = vpack.c.b16 %v239, %v238
    %v243 = vpack.c.b16 %v241, %v240
    %v247 = vsel %vm40, 0, 0
    %249 = vmatprep.subr.bf16.mxu0 0
    %250 = vmatpush1.bf16.msra.mxu0 0
    %251 = vmatprep.subr.bf16.mxu0 0
    %252 = vmatpush1.bf16.msra.mxu0 0
    %253 = vmatprep.subr.bf16.mxu0 0
    %254 = vmatpush1.bf16.msra.mxu0 0
    %255 = vmatprep.subr.bf16.mxu0 0
    %256 = vmatpush1.bf16.msra.mxu0 0
    %257 = vmatprep.subr.bf16.mxu0 0
    %258 = vmatpush1.bf16.msra.mxu0 0
    %259 = vmatprep.subr.bf16.mxu0 0
    %260 = vmatpush1.bf16.msra.mxu0 0
    %261 = vmatprep.subr.bf16.mxu0 0
    %262 = vmatpush1.bf16.msra.mxu0 %v243
    %263 = vmatprep.subr.bf16.mxu0 0
    %264 = vmatpush1.bf16.msra.mxu0 %v242
    %265 = vmatprep.subr.bf16.mxu0 0
    %266 = vmatpush2.bf16.msra.mxu0 0
    %267 = vmatprep.subr.bf16.mxu0 0
    %268 = vmatpush2.bf16.msra.mxu0 0
    %269 = vmatprep.subr.bf16.mxu0 0
    %270 = vmatpush2.bf16.msra.mxu0 0
    %271 = vmatprep.subr.bf16.mxu0 0
    %272 = vmatpush2.bf16.msra.mxu0 0
    %273 = vmatprep.subr.bf16.mxu0 0
    %274 = vmatpush2.bf16.msra.mxu0 0
    %275 = vmatprep.subr.bf16.mxu0 0
    %276 = vmatpush2.bf16.msra.mxu0 0
    %277 = vmatprep.subr.bf16.mxu0 0
    %278 = vmatpush2.bf16.msra.mxu0 0
    %279 = vmatprep.subr.bf16.mxu0 0
    %280 = vmatpush2.bf16.msra.mxu0 0
    %281 = vmatprep.mubr.bf16.mxu0 0
    %282 = vmatmul.mubr.bf16.gmra.mxu0 %v247
    %v283 = vpop.f32.mrf.mxu0
    %v284 = vadd.f32 0.0, %v283
    %v285 = vpop.f32.mrf.mxu0
    %v286 = vpop.f32.mrf.mxu0
    %v287 = vpop.f32.mrf.mxu0
    %288 = vdwg.mxu0
    %v289 = vadd.f32 %v196, %v284
    %v290 = vxor.u32 %v289, 2147483648
    %v291 = vmul.f32 %v290, 1.442695
    %v292 = vpow.pop %v291
    %v293 = vadd.f32 %v292, 1.0
    %v294 = vrcp.pop %v293
    %v295 = vmul.f32 1.0, %v294
    %v296 = vtanh.pop %v289
    %v297 = vmul.f32 %v295, 0.0
    %299 = vrot.lane.b32.xlu0 %v296, 64
    %v300 = vpop.permute.xlu0 %299
    %v302 = vmul.f32 %v295, %v300
    %304 = vrot.lane.b32.xlu0 %v302, 32
    %v305 = vpop.permute.xlu0 %304
    %v307 = vadd.f32 %v297, %v305
    %v308 = vtanh.pop %v307
    %310 = vrot.lane.b32.xlu0 %v308, 64
    %v311 = vpop.permute.xlu0 %310
    %v313 = vmul.f32 %v295, %v311
    %v314 = vpack.c.bf16 %v313, %v313
    %316 = vrot.lane.b32.xlu0 %v314, 32
    %v317 = vpop.permute.xlu0 %316
    %v319 = vsel %vm40, %v317, 0
    %321 = vmatprep.subr.bf16.mxu0 0
    %322 = vmatpush1.bf16.msra.mxu0 0
    %323 = vmatprep.subr.bf16.mxu0 0
    %324 = vmatpush1.bf16.msra.mxu0 0
    %325 = vmatprep.subr.bf16.mxu0 0
    %326 = vmatpush1.bf16.msra.mxu0 0
    %327 = vmatprep.subr.bf16.mxu0 0
    %328 = vmatpush1.bf16.msra.mxu0 0
    %329 = vmatprep.subr.bf16.mxu0 0
    %330 = vmatpush1.bf16.msra.mxu0 0
    %331 = vmatprep.subr.bf16.mxu0 0
    %332 = vmatpush1.bf16.msra.mxu0 0
    %333 = vmatprep.subr.bf16.mxu0 0
    %334 = vmatpush1.bf16.msra.mxu0 %v243
    %335 = vmatprep.subr.bf16.mxu0 0
    %336 = vmatpush1.bf16.msra.mxu0 %v242
    %337 = vmatprep.subr.bf16.mxu0 0
    %338 = vmatpush2.bf16.msra.mxu0 0
    %339 = vmatprep.subr.bf16.mxu0 0
    %340 = vmatpush2.bf16.msra.mxu0 0
    %341 = vmatprep.subr.bf16.mxu0 0
    %342 = vmatpush2.bf16.msra.mxu0 0
    %343 = vmatprep.subr.bf16.mxu0 0
    %344 = vmatpush2.bf16.msra.mxu0 0
    %345 = vmatprep.subr.bf16.mxu0 0
    %346 = vmatpush2.bf16.msra.mxu0 0
    %347 = vmatprep.subr.bf16.mxu0 0
    %348 = vmatpush2.bf16.msra.mxu0 0
    %349 = vmatprep.subr.bf16.mxu0 0
    %350 = vmatpush2.bf16.msra.mxu0 0
    %351 = vmatprep.subr.bf16.mxu0 0
    %352 = vmatpush2.bf16.msra.mxu0 0
    %353 = vmatprep.mubr.bf16.mxu0 0
    %354 = vmatmul.mubr.bf16.gmra.mxu0 %v319
    %v355 = vpop.f32.mrf.mxu0
    %v356 = vadd.f32 0.0, %v355
    %v357 = vpop.f32.mrf.mxu0
    %v358 = vpop.f32.mrf.mxu0
    %v359 = vpop.f32.mrf.mxu0
    %360 = vdwg.mxu0
    %v361 = vadd.f32 %v199, %v356
    %v362 = vxor.u32 %v361, 2147483648
    %v363 = vmul.f32 %v362, 1.442695
    %v364 = vpow.pop %v363
    %v365 = vadd.f32 %v364, 1.0
    %v366 = vrcp.pop %v365
    %v367 = vmul.f32 1.0, %v366
    %v368 = vtanh.pop %v361
    %v369 = vmul.f32 %v367, %v307
    %371 = vrot.lane.b32.xlu0 %v368, 64
    %v372 = vpop.permute.xlu0 %371
    %v374 = vmul.f32 %v367, %v372
    %376 = vrot.lane.b32.xlu0 %v374, 32
    %v377 = vpop.permute.xlu0 %376
    %v379 = vadd.f32 %v369, %v377
    %v380 = vtanh.pop %v379
    %382 = vrot.lane.b32.xlu0 %v380, 64
    %v383 = vpop.permute.xlu0 %382
    %v385 = vmul.f32 %v367, %v383
    %v386 = vpack.c.bf16 %v385, %v385
    %388 = vrot.lane.b32.xlu0 %v386, 32
    %v389 = vpop.permute.xlu0 %388
    %v391 = vsel %vm40, %v389, 0
    %393 = vmatprep.subr.bf16.mxu0 0
    %394 = vmatpush1.bf16.msra.mxu0 0
    %395 = vmatprep.subr.bf16.mxu0 0
    %396 = vmatpush1.bf16.msra.mxu0 0
    %397 = vmatprep.subr.bf16.mxu0 0
    %398 = vmatpush1.bf16.msra.mxu0 0
    %399 = vmatprep.subr.bf16.mxu0 0
    %400 = vmatpush1.bf16.msra.mxu0 0
    %401 = vmatprep.subr.bf16.mxu0 0
    %402 = vmatpush1.bf16.msra.mxu0 0
    %403 = vmatprep.subr.bf16.mxu0 0
    %404 = vmatpush1.bf16.msra.mxu0 0
    %405 = vmatprep.subr.bf16.mxu0 0
    %406 = vmatpush1.bf16.msra.mxu0 %v243
    %407 = vmatprep.subr.bf16.mxu0 0
    %408 = vmatpush1.bf16.msra.mxu0 %v242
    %409 = vmatprep.subr.bf16.mxu0 0
    %410 = vmatpush2.bf16.msra.mxu0 0
    %411 = vmatprep.subr.bf16.mxu0 0
    %412 = vmatpush2.bf16.msra.mxu0 0
    %413 = vmatprep.subr.bf16.mxu0 0
    %414 = vmatpush2.bf16.msra.mxu0 0
    %415 = vmatprep.subr.bf16.mxu0 0
    %416 = vmatpush2.bf16.msra.mxu0 0
    %417 = vmatprep.subr.bf16.mxu0 0
    %418 = vmatpush2.bf16.msra.mxu0 0
    %419 = vmatprep.subr.bf16.mxu0 0
    %420 = vmatpush2.bf16.msra.mxu0 0
    %421 = vmatprep.subr.bf16.mxu0 0
    %422 = vmatpush2.bf16.msra.mxu0 0
    %423 = vmatprep.subr.bf16.mxu0 0
    %424 = vmatpush2.bf16.msra.mxu0 0
    %425 = vmatprep.mubr.bf16.mxu0 0
    %426 = vmatmul.mubr.bf16.gmra.mxu0 %v391
    %v427 = vpop.f32.mrf.mxu0
    %v428 = vadd.f32 0.0, %v427
    %v429 = vpop.f32.mrf.mxu0
    %v430 = vpop.f32.mrf.mxu0
    %v431 = vpop.f32.mrf.mxu0
    %432 = vdwg.mxu0
    %v433 = vadd.f32 %v204, %v428
    %v434 = vxor.u32 %v433, 2147483648
    %v435 = vmul.f32 %v434, 1.442695
    %v436 = vpow.pop %v435
    %v437 = vadd.f32 %v436, 1.0
    %v438 = vrcp.pop %v437
    %v439 = vmul.f32 1.0, %v438
    %v440 = vtanh.pop %v433
    %v441 = vmul.f32 %v439, %v379
    %443 = vrot.lane.b32.xlu0 %v440, 64
    %v444 = vpop.permute.xlu0 %443
    %v446 = vmul.f32 %v439, %v444
    %448 = vrot.lane.b32.xlu0 %v446, 32
    %v449 = vpop.permute.xlu0 %448
    %v451 = vadd.f32 %v441, %v449
    %v452 = vtanh.pop %v451
    %454 = vrot.lane.b32.xlu0 %v452, 64
    %v455 = vpop.permute.xlu0 %454
    %v457 = vmul.f32 %v439, %v455
    %v458 = vpack.c.bf16 %v457, %v457
    %460 = vrot.lane.b32.xlu0 %v458, 32
    %v461 = vpop.permute.xlu0 %460
    %v463 = vsel %vm40, %v461, 0
    %465 = vmatprep.subr.bf16.mxu0 0
    %466 = vmatpush1.bf16.msra.mxu0 0
    %467 = vmatprep.subr.bf16.mxu0 0
    %468 = vmatpush1.bf16.msra.mxu0 0
    %469 = vmatprep.subr.bf16.mxu0 0
    %470 = vmatpush1.bf16.msra.mxu0 0
    %471 = vmatprep.subr.bf16.mxu0 0
    %472 = vmatpush1.bf16.msra.mxu0 0
    %473 = vmatprep.subr.bf16.mxu0 0
    %474 = vmatpush1.bf16.msra.mxu0 0
    %475 = vmatprep.subr.bf16.mxu0 0
    %476 = vmatpush1.bf16.msra.mxu0 0
    %477 = vmatprep.subr.bf16.mxu0 0
    %478 = vmatpush1.bf16.msra.mxu0 %v243
    %479 = vmatprep.subr.bf16.mxu0 0
    %480 = vmatpush1.bf16.msra.mxu0 %v242
    %481 = vmatprep.subr.bf16.mxu0 0
    %482 = vmatpush2.bf16.msra.mxu0 0
    %483 = vmatprep.subr.bf16.mxu0 0
    %484 = vmatpush2.bf16.msra.mxu0 0
    %485 = vmatprep.subr.bf16.mxu0 0
    %486 = vmatpush2.bf16.msra.mxu0 0
    %487 = vmatprep.subr.bf16.mxu0 0
    %488 = vmatpush2.bf16.msra.mxu0 0
    %489 = vmatprep.subr.bf16.mxu0 0
    %490 = vmatpush2.bf16.msra.mxu0 0
    %491 = vmatprep.subr.bf16.mxu0 0
    %492 = vmatpush2.bf16.msra.mxu0 0
    %493 = vmatprep.subr.bf16.mxu0 0
    %494 = vmatpush2.bf16.msra.mxu0 0
    %495 = vmatprep.subr.bf16.mxu0 0
    %496 = vmatpush2.bf16.msra.mxu0 0
    %497 = vmatprep.mubr.bf16.mxu0 0
    %498 = vmatmul.mubr.bf16.gmra.mxu0 %v463
    %v499 = vpop.f32.mrf.mxu0
    %v500 = vadd.f32 0.0, %v499
    %v501 = vpop.f32.mrf.mxu0
    %v502 = vpop.f32.mrf.mxu0
    %v503 = vpop.f32.mrf.mxu0
    %504 = vdwg.mxu0
    %v505 = vadd.f32 %v207, %v500
    %v506 = vxor.u32 %v505, 2147483648
    %v507 = vmul.f32 %v506, 1.442695
    %v508 = vpow.pop %v507
    %v509 = vadd.f32 %v508, 1.0
    %v510 = vrcp.pop %v509
    %v511 = vmul.f32 1.0, %v510
    %v512 = vtanh.pop %v505
    %v513 = vmul.f32 %v511, %v451
    %515 = vrot.lane.b32.xlu0 %v512, 64
    %v516 = vpop.permute.xlu0 %515
    %v518 = vmul.f32 %v511, %v516
    %520 = vrot.lane.b32.xlu0 %v518, 32
    %v521 = vpop.permute.xlu0 %520
    %v523 = vadd.f32 %v513, %v521
    %v524 = vtanh.pop %v523
    %526 = vrot.lane.b32.xlu0 %v524, 64
    %v527 = vpop.permute.xlu0 %526
    %v529 = vmul.f32 %v511, %v527
    %v530 = vpack.c.bf16 %v529, %v529
    %532 = vrot.lane.b32.xlu0 %v530, 32
    %v533 = vpop.permute.xlu0 %532
    %v535 = vsel %vm40, %v533, 0
    %537 = vmatprep.subr.bf16.mxu0 0
    %538 = vmatpush1.bf16.msra.mxu0 0
    %539 = vmatprep.subr.bf16.mxu0 0
    %540 = vmatpush1.bf16.msra.mxu0 0
    %541 = vmatprep.subr.bf16.mxu0 0
    %542 = vmatpush1.bf16.msra.mxu0 0
    %543 = vmatprep.subr.bf16.mxu0 0
    %544 = vmatpush1.bf16.msra.mxu0 0
    %545 = vmatprep.subr.bf16.mxu0 0
    %546 = vmatpush1.bf16.msra.mxu0 0
    %547 = vmatprep.subr.bf16.mxu0 0
    %548 = vmatpush1.bf16.msra.mxu0 0
    %549 = vmatprep.subr.bf16.mxu0 0
    %550 = vmatpush1.bf16.msra.mxu0 %v243
    %551 = vmatprep.subr.bf16.mxu0 0
    %552 = vmatpush1.bf16.msra.mxu0 %v242
    %553 = vmatprep.subr.bf16.mxu0 0
    %554 = vmatpush2.bf16.msra.mxu0 0
    %555 = vmatprep.subr.bf16.mxu0 0
    %556 = vmatpush2.bf16.msra.mxu0 0
    %557 = vmatprep.subr.bf16.mxu0 0
    %558 = vmatpush2.bf16.msra.mxu0 0
    %559 = vmatprep.subr.bf16.mxu0 0
    %560 = vmatpush2.bf16.msra.mxu0 0
    %561 = vmatprep.subr.bf16.mxu0 0
    %562 = vmatpush2.bf16.msra.mxu0 0
    %563 = vmatprep.subr.bf16.mxu0 0
    %564 = vmatpush2.bf16.msra.mxu0 0
    %565 = vmatprep.subr.bf16.mxu0 0
    %566 = vmatpush2.bf16.msra.mxu0 0
    %567 = vmatprep.subr.bf16.mxu0 0
    %568 = vmatpush2.bf16.msra.mxu0 0
    %569 = vmatprep.mubr.bf16.mxu0 0
    %570 = vmatmul.mubr.bf16.gmra.mxu0 %v535
    %v571 = vpop.f32.mrf.mxu0
    %v572 = vadd.f32 0.0, %v571
    %v573 = vpop.f32.mrf.mxu0
    %v574 = vpop.f32.mrf.mxu0
    %v575 = vpop.f32.mrf.mxu0
    %576 = vdwg.mxu0
    %v577 = vadd.f32 %v212, %v572
    %v578 = vxor.u32 %v577, 2147483648
    %v579 = vmul.f32 %v578, 1.442695
    %v580 = vpow.pop %v579
    %v581 = vadd.f32 %v580, 1.0
    %v582 = vrcp.pop %v581
    %v583 = vmul.f32 1.0, %v582
    %v584 = vtanh.pop %v577
    %v585 = vmul.f32 %v583, %v523
    %587 = vrot.lane.b32.xlu0 %v584, 64
    %v588 = vpop.permute.xlu0 %587
    %v590 = vmul.f32 %v583, %v588
    %592 = vrot.lane.b32.xlu0 %v590, 32
    %v593 = vpop.permute.xlu0 %592
    %v595 = vadd.f32 %v585, %v593
    %v596 = vtanh.pop %v595
    %598 = vrot.lane.b32.xlu0 %v596, 64
    %v599 = vpop.permute.xlu0 %598
    %v601 = vmul.f32 %v583, %v599
    %v602 = vpack.c.bf16 %v601, %v601
    %604 = vrot.lane.b32.xlu0 %v602, 32
    %v605 = vpop.permute.xlu0 %604
    %v607 = vsel %vm40, %v605, 0
    %609 = vmatprep.subr.bf16.mxu0 0
    %610 = vmatpush1.bf16.msra.mxu0 0
    %611 = vmatprep.subr.bf16.mxu0 0
    %612 = vmatpush1.bf16.msra.mxu0 0
    %613 = vmatprep.subr.bf16.mxu0 0
    %614 = vmatpush1.bf16.msra.mxu0 0
    %615 = vmatprep.subr.bf16.mxu0 0
    %616 = vmatpush1.bf16.msra.mxu0 0
    %617 = vmatprep.subr.bf16.mxu0 0
    %618 = vmatpush1.bf16.msra.mxu0 0
    %619 = vmatprep.subr.bf16.mxu0 0
    %620 = vmatpush1.bf16.msra.mxu0 0
    %621 = vmatprep.subr.bf16.mxu0 0
    %622 = vmatpush1.bf16.msra.mxu0 %v243
    %623 = vmatprep.subr.bf16.mxu0 0
    %624 = vmatpush1.bf16.msra.mxu0 %v242
    %625 = vmatprep.subr.bf16.mxu0 0
    %626 = vmatpush2.bf16.msra.mxu0 0
    %627 = vmatprep.subr.bf16.mxu0 0
    %628 = vmatpush2.bf16.msra.mxu0 0
    %629 = vmatprep.subr.bf16.mxu0 0
    %630 = vmatpush2.bf16.msra.mxu0 0
    %631 = vmatprep.subr.bf16.mxu0 0
    %632 = vmatpush2.bf16.msra.mxu0 0
    %633 = vmatprep.subr.bf16.mxu0 0
    %634 = vmatpush2.bf16.msra.mxu0 0
    %635 = vmatprep.subr.bf16.mxu0 0
    %636 = vmatpush2.bf16.msra.mxu0 0
    %637 = vmatprep.subr.bf16.mxu0 0
    %638 = vmatpush2.bf16.msra.mxu0 0
    %639 = vmatprep.subr.bf16.mxu0 0
    %640 = vmatpush2.bf16.msra.mxu0 0
    %641 = vmatprep.mubr.bf16.mxu0 0
    %642 = vmatmul.mubr.bf16.gmra.mxu0 %v607
    %v643 = vpop.f32.mrf.mxu0
    %v644 = vadd.f32 0.0, %v643
    %v645 = vpop.f32.mrf.mxu0
    %v646 = vpop.f32.mrf.mxu0
    %v647 = vpop.f32.mrf.mxu0
    %648 = vdwg.mxu0
    %v649 = vadd.f32 %v215, %v644
    %v650 = vxor.u32 %v649, 2147483648
    %v651 = vmul.f32 %v650, 1.442695
    %v652 = vpow.pop %v651
    %v653 = vadd.f32 %v652, 1.0
    %v654 = vrcp.pop %v653
    %v655 = vmul.f32 1.0, %v654
    %v656 = vtanh.pop %v649
    %v657 = vmul.f32 %v655, %v595
    %659 = vrot.lane.b32.xlu0 %v656, 64
    %v660 = vpop.permute.xlu0 %659
    %v662 = vmul.f32 %v655, %v660
    %664 = vrot.lane.b32.xlu0 %v662, 32
    %v665 = vpop.permute.xlu0 %664
    %v667 = vadd.f32 %v657, %v665
    %v668 = vtanh.pop %v667
    %670 = vrot.lane.b32.xlu0 %v668, 64
    %v671 = vpop.permute.xlu0 %670
    %v673 = vmul.f32 %v655, %v671
    %v674 = vpack.c.bf16 %v673, %v673
    %676 = vrot.lane.b32.xlu0 %v674, 32
    %v677 = vpop.permute.xlu0 %676
    %v679 = vsel %vm40, %v677, 0
    %681 = vmatprep.subr.bf16.mxu0 0
    %682 = vmatpush1.bf16.msra.mxu0 0
    %683 = vmatprep.subr.bf16.mxu0 0
    %684 = vmatpush1.bf16.msra.mxu0 0
    %685 = vmatprep.subr.bf16.mxu0 0
    %686 = vmatpush1.bf16.msra.mxu0 0
    %687 = vmatprep.subr.bf16.mxu0 0
    %688 = vmatpush1.bf16.msra.mxu0 0
    %689 = vmatprep.subr.bf16.mxu0 0
    %690 = vmatpush1.bf16.msra.mxu0 0
    %691 = vmatprep.subr.bf16.mxu0 0
    %692 = vmatpush1.bf16.msra.mxu0 0
    %693 = vmatprep.subr.bf16.mxu0 0
    %694 = vmatpush1.bf16.msra.mxu0 %v243
    %695 = vmatprep.subr.bf16.mxu0 0
    %696 = vmatpush1.bf16.msra.mxu0 %v242
    %697 = vmatprep.subr.bf16.mxu0 0
    %698 = vmatpush2.bf16.msra.mxu0 0
    %699 = vmatprep.subr.bf16.mxu0 0
    %700 = vmatpush2.bf16.msra.mxu0 0
    %701 = vmatprep.subr.bf16.mxu0 0
    %702 = vmatpush2.bf16.msra.mxu0 0
    %703 = vmatprep.subr.bf16.mxu0 0
    %704 = vmatpush2.bf16.msra.mxu0 0
    %705 = vmatprep.subr.bf16.mxu0 0
    %706 = vmatpush2.bf16.msra.mxu0 0
    %707 = vmatprep.subr.bf16.mxu0 0
    %708 = vmatpush2.bf16.msra.mxu0 0
    %709 = vmatprep.subr.bf16.mxu0 0
    %710 = vmatpush2.bf16.msra.mxu0 0
    %711 = vmatprep.subr.bf16.mxu0 0
    %712 = vmatpush2.bf16.msra.mxu0 0
    %713 = vmatprep.mubr.bf16.mxu0 0
    %714 = vmatmul.mubr.bf16.gmra.mxu0 %v679
    %v715 = vpop.f32.mrf.mxu0
    %v716 = vadd.f32 0.0, %v715
    %v717 = vpop.f32.mrf.mxu0
    %v718 = vpop.f32.mrf.mxu0
    %v719 = vpop.f32.mrf.mxu0
    %720 = vdwg.mxu0
    %v721 = vadd.f32 %v220, %v716
    %v722 = vxor.u32 %v721, 2147483648
    %v723 = vmul.f32 %v722, 1.442695
    %v724 = vpow.pop %v723
    %v725 = vadd.f32 %v724, 1.0
    %v726 = vrcp.pop %v725
    %v727 = vmul.f32 1.0, %v726
    %v728 = vtanh.pop %v721
    %v729 = vmul.f32 %v727, %v667
    %731 = vrot.lane.b32.xlu0 %v728, 64
    %v732 = vpop.permute.xlu0 %731
    %v734 = vmul.f32 %v727, %v732
    %736 = vrot.lane.b32.xlu0 %v734, 32
    %v737 = vpop.permute.xlu0 %736
    %v739 = vadd.f32 %v729, %v737
    %v740 = vtanh.pop %v739
    %742 = vrot.lane.b32.xlu0 %v740, 64
    %v743 = vpop.permute.xlu0 %742
    %v745 = vmul.f32 %v727, %v743
    %v746 = vpack.c.bf16 %v745, %v745
    %748 = vrot.lane.b32.xlu0 %v746, 32
    %v749 = vpop.permute.xlu0 %748
    %v751 = vsel %vm40, %v749, 0
    %753 = vmatprep.subr.bf16.mxu0 0
    %754 = vmatpush1.bf16.msra.mxu0 0
    %755 = vmatprep.subr.bf16.mxu0 0
    %756 = vmatpush1.bf16.msra.mxu0 0
    %757 = vmatprep.subr.bf16.mxu0 0
    %758 = vmatpush1.bf16.msra.mxu0 0
    %759 = vmatprep.subr.bf16.mxu0 0
    %760 = vmatpush1.bf16.msra.mxu0 0
    %761 = vmatprep.subr.bf16.mxu0 0
    %762 = vmatpush1.bf16.msra.mxu0 0
    %763 = vmatprep.subr.bf16.mxu0 0
    %764 = vmatpush1.bf16.msra.mxu0 0
    %765 = vmatprep.subr.bf16.mxu0 0
    %766 = vmatpush1.bf16.msra.mxu0 %v243
    %767 = vmatprep.subr.bf16.mxu0 0
    %768 = vmatpush1.bf16.msra.mxu0 %v242
    %769 = vmatprep.subr.bf16.mxu0 0
    %770 = vmatpush2.bf16.msra.mxu0 0
    %771 = vmatprep.subr.bf16.mxu0 0
    %772 = vmatpush2.bf16.msra.mxu0 0
    %773 = vmatprep.subr.bf16.mxu0 0
    %774 = vmatpush2.bf16.msra.mxu0 0
    %775 = vmatprep.subr.bf16.mxu0 0
    %776 = vmatpush2.bf16.msra.mxu0 0
    %777 = vmatprep.subr.bf16.mxu0 0
    %778 = vmatpush2.bf16.msra.mxu0 0
    %779 = vmatprep.subr.bf16.mxu0 0
    %780 = vmatpush2.bf16.msra.mxu0 0
    %781 = vmatprep.subr.bf16.mxu0 0
    %782 = vmatpush2.bf16.msra.mxu0 0
    %783 = vmatprep.subr.bf16.mxu0 0
    %784 = vmatpush2.bf16.msra.mxu0 0
    %785 = vmatprep.mubr.bf16.mxu0 0
    %786 = vmatmul.mubr.bf16.gmra.mxu0 %v751
    %v787 = vpop.f32.mrf.mxu0
    %v788 = vadd.f32 0.0, %v787
    %v789 = vpop.f32.mrf.mxu0
    %v790 = vpop.f32.mrf.mxu0
    %v791 = vpop.f32.mrf.mxu0
    %792 = vdwg.mxu0
    %v793 = vadd.f32 %v223, %v788
    %v794 = vxor.u32 %v793, 2147483648
    %v795 = vmul.f32 %v794, 1.442695
    %v796 = vpow.pop %v795
    %v797 = vadd.f32 %v796, 1.0
    %v798 = vrcp.pop %v797
    %v799 = vmul.f32 1.0, %v798
    %v800 = vtanh.pop %v793
    %v801 = vmul.f32 %v799, %v739
    %803 = vrot.lane.b32.xlu0 %v800, 64
    %v804 = vpop.permute.xlu0 %803
    %v806 = vmul.f32 %v799, %v804
    %808 = vrot.lane.b32.xlu0 %v806, 32
    %v809 = vpop.permute.xlu0 %808
    %v811 = vadd.f32 %v801, %v809
    %v812 = vtanh.pop %v811
    %814 = vrot.lane.b32.xlu0 %v812, 64
    %v815 = vpop.permute.xlu0 %814
    %v817 = vmul.f32 %v799, %v815
    %v818 = vpack.c.bf16 %v817, %v817
    %v819 = vld [vmem:[%s6] sm:$0x1]
    %v821 = vlaneseq
    %v822 = vshrl.u32 %v821, 7
    %v823 = vsub.s32 0, %v822
    %v824 = vrot.slane %v819, %v823
    %827 = vrot.lane.b32.xlu0 %v818, 32
    %v828 = vpop.permute.xlu0 %827
    %v833 = vunpack.c.l.b16 %v230
    %v834 = vunpack.c.l.b16 %v231
    %v835 = vunpack.c.l.b16 %v232
    %v836 = vunpack.c.l.b16 %v233
    %v837 = vpack.c.b16 %v834, %v833
    %v838 = vpack.c.b16 %v836, %v835
    %v842 = vsel %vm40, %v828, 0
    %844 = vmatprep.subr.bf16.mxu0 0
    %845 = vmatpush1.bf16.msra.mxu0 0
    %846 = vmatprep.subr.bf16.mxu0 0
    %847 = vmatpush1.bf16.msra.mxu0 0
    %848 = vmatprep.subr.bf16.mxu0 0
    %849 = vmatpush1.bf16.msra.mxu0 0
    %850 = vmatprep.subr.bf16.mxu0 0
    %851 = vmatpush1.bf16.msra.mxu0 0
    %852 = vmatprep.subr.bf16.mxu0 0
    %853 = vmatpush1.bf16.msra.mxu0 0
    %854 = vmatprep.subr.bf16.mxu0 0
    %855 = vmatpush1.bf16.msra.mxu0 0
    %856 = vmatprep.subr.bf16.mxu0 0
    %857 = vmatpush1.bf16.msra.mxu0 %v838
    %858 = vmatprep.subr.bf16.mxu0 0
    %859 = vmatpush1.bf16.msra.mxu0 %v837
    %860 = vmatprep.subr.bf16.mxu0 0
    %861 = vmatpush2.bf16.msra.mxu0 0
    %862 = vmatprep.subr.bf16.mxu0 0
    %863 = vmatpush2.bf16.msra.mxu0 0
    %864 = vmatprep.subr.bf16.mxu0 0
    %865 = vmatpush2.bf16.msra.mxu0 0
    %866 = vmatprep.subr.bf16.mxu0 0
    %867 = vmatpush2.bf16.msra.mxu0 0
    %868 = vmatprep.subr.bf16.mxu0 0
    %869 = vmatpush2.bf16.msra.mxu0 0
    %870 = vmatprep.subr.bf16.mxu0 0
    %871 = vmatpush2.bf16.msra.mxu0 0
    %872 = vmatprep.subr.bf16.mxu0 0
    %873 = vmatpush2.bf16.msra.mxu0 0
    %874 = vmatprep.subr.bf16.mxu0 0
    %875 = vmatpush2.bf16.msra.mxu0 0
    %876 = vmatprep.mubr.bf16.mxu0 0
    %877 = vmatmul.mubr.bf16.gmra.mxu0 %v842
    %v878 = vpop.f32.mrf.mxu0
    %v879 = vadd.f32 %v824, %v878
    %v880 = vpop.f32.mrf.mxu0
    %v881 = vpop.f32.mrf.mxu0
    %v882 = vpop.f32.mrf.mxu0
    %883 = vdwg.mxu0
    %vm884 = vcmask 31744
    %885 = vst.msk [vmem:[%s7] sm:$0xff] %vm884, %v879
    // Predicated region
    $region34: #{french_sentiment_forward.1} parent=1 // pred_check
      _
    $region35: #{french_sentiment_forward.1} parent=1 // pred_check_branch
      %887 = sbr.rel (0) target = $region37
    $region36: #{french_sentiment_forward.1} parent=1 // pred_region
      _
    $region37: #{french_sentiment_forward.1} parent=1 // pred_fallthru
      _
    // Predicated region
    $region38: #{french_sentiment_forward.1} parent=1 // pred_check
      _
    $region39: #{french_sentiment_forward.1} parent=1 // pred_check_branch
      %889 = sbr.rel (0) target = $region41
    $region40: #{french_sentiment_forward.1} parent=1 // pred_region
      _
    $region41: #{french_sentiment_forward.1} parent=1 // pred_fallthru
      _
    %890 = vsyncpa [#allocation4], 1

</llo_original>
